<compile_context>
chip_gen: v7x
topology: tpu7x:2x2x1
jax: 0.10.0
libtpu: 0.0.40
codegen_flags: <defaults>
</compile_context>

<pallas_src>
import jax
import jax.numpy as jnp
from jax.experimental import pallas as pl
from jax.experimental.pallas import tpu as pltpu


IN_DIM = 28 * 28
NUM_CLASSES = 10
OUT_PAD = 128  # lane-dense output width


def _round_up(a, m):
    return ((a + m - 1) // m) * m


def _mlp2_kernel(x_ref, w1_ref, b1_ref, w2_ref, b2_ref, w3_ref, b3_ref, o_ref):
    """Fused: sigmoid(x@W1+b1) -> sigmoid(.@W2'+b2) -> .@W3'+b3 -> log_softmax.

    Mean-field scales are pre-folded into W2'/W3'. x arrives in its HBM dtype
    (f32) and is cast to bf16 here (VPU cast is hidden under the DMA time).
    All matmuls accumulate in f32; elementwise math is f32. The output block is
    (tb, 128); padded class lanes carry a -1e30 bias so they neither win the
    max nor contribute to the softmax sum.
    """
    x = x_ref[...].astype(jnp.bfloat16)                              # (tb, 784)

    # Layer 1: Linear + sigmoid (f32 accumulate / f32 activation).
    z1 = jnp.dot(x, w1_ref[...], preferred_element_type=jnp.float32) + b1_ref[...]
    h1 = jax.nn.sigmoid(z1).astype(jnp.bfloat16)

    # Layer 2: Linear (scale1 folded into W2) + sigmoid.
    z2 = jnp.dot(h1, w2_ref[...], preferred_element_type=jnp.float32) + b2_ref[...]
    h2 = jax.nn.sigmoid(z2).astype(jnp.bfloat16)

    # Layer 3: Linear (scale2 folded into W3, padded to 128 output lanes).
    logits = jnp.dot(h2, w3_ref[...], preferred_element_type=jnp.float32) + b3_ref[...]

    # log_softmax along the class axis (padded lanes ~ -1e30 -> ignored).
    m = jnp.max(logits, axis=-1, keepdims=True)
    shifted = logits - m
    lse = jnp.log(jnp.sum(jnp.exp(shifted), axis=-1, keepdims=True))
    o_ref[...] = (shifted - lse).astype(o_ref.dtype)


def prepare_mlp2_params(params, gamma_1, gamma_2):
    """Fold scales into W2/W3, pad W3/b3 to 128 lanes, cast weights to bf16.

    Do this ONCE and reuse the result across forward calls (avoids re-launching
    the folding HLOs on every inference call).
    Returns (w1_bf16, b1_f32, w2_bf16, b2_f32, w3pad_bf16, b3pad_f32, out_dim).
    """
    w1, b1, w2, b2, w3, b3 = params            # W: (in, out); b: (1, out), f32
    H1, H2 = w1.shape[1], w2.shape[1]
    out_dim = w3.shape[1]

    scale1 = float(H1) ** (-float(gamma_1))
    scale2 = float(H2) ** (-float(gamma_2))

    # Fold the mean-field scales into the *next* layer's weights (exact math):
    #   (s * sigmoid(z)) @ W == sigmoid(z) @ (s * W)
    w2f = w2 * scale1
    w3f = w3 * scale2

    # Pad the output dim to 128 lanes; padded logits get a huge negative bias
    # (kept in f32) so the in-kernel log_softmax ignores them.
    w3p = jnp.zeros((H2, OUT_PAD), jnp.float32).at[:, :out_dim].set(w3f)
    b3p = jnp.full((1, OUT_PAD), -1e30, jnp.float32).at[:, :out_dim].set(b3)

    return (w1.astype(jnp.bfloat16),
            b1.astype(jnp.float32),
            w2f.astype(jnp.bfloat16),
            b2.astype(jnp.float32),
            w3p.astype(jnp.bfloat16),
            b3p,
            out_dim)


def _pick_batch_tile(B, block_b):
    """Batch-tile rows and grid size. No host-side padding of x is ever done:
    the last grid block may be ragged (Pallas masks OOB output rows; OOB input
    rows only feed row-independent math and are sliced away)."""
    if B < 8:
        return B, 1                                   # full-array block
    cap = max(16, (int(block_b) // 16) * 16)
    n = -(-B // cap)                                  # ceil(B / cap)
    if B >= 256:
        n = max(n, 2)                                 # keep both v7x TCs fed
    tb = _round_up(-(-B // n), 16)                    # bf16 sublane packing
    tb = min(tb, (B // 8) * 8)                        # never exceed the array
    tb = max(tb, 8)
    return tb, -(-B // tb)


def mlp2_forward_prepared(x, prepared, *, block_b=2048):
    """Run the fused MLP2 forward with pre-folded params.
    x: any shape flattening to (B, 784); returned log-probs are (B, out_dim) f32."""
    w1b, b1, w2b, b2, w3b, b3p, out_dim = prepared
    x2d = x.reshape(-1, IN_DIM)                       # native dtype; cast in-kernel
    B = x2d.shape[0]
    H1 = w1b.shape[1]
    H2 = w2b.shape[1]

    tb, grid_b = _pick_batch_tile(B, block_b)

    x_bytes = int(x2d.dtype.itemsize)
    cost = pl.CostEstimate(
        flops=2 * B * (IN_DIM * H1 + H1 * H2 + H2 * OUT_PAD),
        transcendentals=B * (H1 + H2 + OUT_PAD),
        bytes_accessed=(B * IN_DIM * x_bytes
                        + (IN_DIM * H1 + H1 * H2 + H2 * OUT_PAD) * 2
                        + (H1 + H2 + OUT_PAD) * 4
                        + B * OUT_PAD * 4),
    )

    out = pl.pallas_call(
        _mlp2_kernel,
        out_shape=jax.ShapeDtypeStruct((B, OUT_PAD), jnp.float32),
        grid=(grid_b,),
        in_specs=[
            pl.BlockSpec((tb, IN_DIM), lambda i: (i, 0)),      # x tile (native dtype)
            pl.BlockSpec((IN_DIM, H1), lambda i: (0, 0)),      # W1 (bf16)
            pl.BlockSpec((1, H1), lambda i: (0, 0)),           # b1 (f32)
            pl.BlockSpec((H1, H2), lambda i: (0, 0)),          # W2 * scale1 (bf16)
            pl.BlockSpec((1, H2), lambda i: (0, 0)),           # b2 (f32)
            pl.BlockSpec((H2, OUT_PAD), lambda i: (0, 0)),     # W3 * scale2, padded (bf16)
            pl.BlockSpec((1, OUT_PAD), lambda i: (0, 0)),      # b3 padded (f32)
        ],
        out_specs=pl.BlockSpec((tb, OUT_PAD), lambda i: (i, 0)),
        compiler_params=pltpu.CompilerParams(
            dimension_semantics=("parallel",),
            # Audited: at tb=2048 total live VMEM (f32 x tile x2 + f32 out tile x2
            # + weights + intermediates) is ~20 MiB, so 64 MiB is safe headroom on
            # all of v5e/v6e/v7x (v7x physical VMEM = 64 MiB).
            vmem_limit_bytes=64 * 1024 * 1024,
        ),
        cost_estimate=cost,
    )(x2d, w1b, b1, w2b, b2, w3b, b3p)

    return out[:, :out_dim]


def mlp2_forward(x, params, gamma_1, gamma_2, *, block_b=2048):
    """Convenience wrapper: fold params every call (prefer prepare_mlp2_params +
    mlp2_forward_prepared for repeated inference)."""
    return mlp2_forward_prepared(
        x, prepare_mlp2_params(params, gamma_1, gamma_2), block_b=block_b)


def init_params(key, hidden_units_1, hidden_units_2):
    """Deterministic init mirroring the PyTorch module's __init__ shapes.

    Weights are stored transposed: (in_features, out_features).
    fc1/fc2 weights ~ N(0, 1); fc3 weights ~ U(0, 1);
    biases follow nn.Linear's default U(-1/sqrt(fan_in), 1/sqrt(fan_in)).
    """
    k1, k2, k3, kb1, kb2, kb3 = jax.random.split(key, 6)
    w1 = jax.random.normal(k1, (IN_DIM, hidden_units_1), jnp.float32)
    w2 = jax.random.normal(k2, (hidden_units_1, hidden_units_2), jnp.float32)
    w3 = jax.random.uniform(k3, (hidden_units_2, NUM_CLASSES), jnp.float32, 0.0, 1.0)

    bnd1 = 1.0 / jnp.sqrt(IN_DIM)
    bnd2 = 1.0 / jnp.sqrt(hidden_units_1)
    bnd3 = 1.0 / jnp.sqrt(hidden_units_2)
    b1 = jax.random.uniform(kb1, (1, hidden_units_1), jnp.float32, -bnd1, bnd1)
    b2 = jax.random.uniform(kb2, (1, hidden_units_2), jnp.float32, -bnd2, bnd2)
    b3 = jax.random.uniform(kb3, (1, NUM_CLASSES), jnp.float32, -bnd3, bnd3)
    return (w1, b1, w2, b2, w3, b3)


def mlp2_kernel_reference(x, params, gamma_1, gamma_2):
    """Pure-JAX reference mirroring the kernel's mixed-precision scheme
    (bf16 operands, f32 accumulation/activations, scales folded into weights)."""
    w1, b1, w2, b2, w3, b3 = params
    x2d = x.reshape(-1, IN_DIM)
    s1 = float(w1.shape[1]) ** (-float(gamma_1))
    s2 = float(w2.shape[1]) ** (-float(gamma_2))
    hp = jax.lax.Precision.HIGHEST
    bf16, f32 = jnp.bfloat16, jnp.float32

    z1 = jnp.dot(x2d.astype(bf16), w1.astype(bf16),
                 preferred_element_type=f32, precision=hp) + b1
    h1 = jax.nn.sigmoid(z1).astype(bf16)
    z2 = jnp.dot(h1, (w2 * s1).astype(bf16),
                 preferred_element_type=f32, precision=hp) + b2
    h2 = jax.nn.sigmoid(z2).astype(bf16)
    logits = jnp.dot(h2, (w3 * s2).astype(bf16),
                     preferred_element_type=f32, precision=hp) + b3
    return jax.nn.log_softmax(logits, axis=1)


def mlp2_reference_f32(x, params, gamma_1, gamma_2):
    """Full-f32 reference of the original PyTorch module semantics."""
    w1, b1, w2, b2, w3, b3 = params
    x2d = x.reshape(-1, IN_DIM)
    h1 = (w1.shape[1] ** (-gamma_1)) * jax.nn.sigmoid(x2d @ w1 + b1)
    h2 = (w2.shape[1] ** (-gamma_2)) * jax.nn.sigmoid(h1 @ w2 + b2)
    logits = h2 @ w3 + b3
    return jax.nn.log_softmax(logits, axis=1)


if __name__ == "__main__":
    hidden_units_1 = 32
    hidden_units_2 = 32
    gamma_1 = 0.5
    gamma_2 = 0.5

    key = jax.random.PRNGKey(0)
    kx, kx2, kp = jax.random.split(key, 3)

    params = init_params(kp, hidden_units_1, hidden_units_2)
    prepared = prepare_mlp2_params(params, gamma_1, gamma_2)  # fold once, reuse

    # Case 1: small MNIST-like batch (single grid step).
    batch = 8
    x = jax.random.normal(kx, (batch, 1, 28, 28), jnp.float32)
    out = jax.block_until_ready(mlp2_forward_prepared(x, prepared))
    assert out.shape == (batch, NUM_CLASSES), out.shape

    ref_mp = mlp2_kernel_reference(x, params, gamma_1, gamma_2)
    assert jnp.allclose(out, ref_mp, atol=2e-3, rtol=2e-3), "mismatch vs mixed-precision reference"
    ref_f32 = mlp2_reference_f32(x, params, gamma_1, gamma_2)
    assert jnp.allclose(out, ref_f32, atol=1e-1, rtol=1e-1), "mismatch vs f32 semantics reference"

    # Case 2: ragged batch (exercises the masked last grid block, no host pad).
    batch2 = 20
    x2 = jax.random.normal(kx2, (batch2, 1, 28, 28), jnp.float32)
    out2 = jax.block_until_ready(mlp2_forward_prepared(x2, prepared))
    assert out2.shape == (batch2, NUM_CLASSES), out2.shape
    ref2 = mlp2_kernel_reference(x2, params, gamma_1, gamma_2)
    assert jnp.allclose(out2, ref2, atol=2e-3, rtol=2e-3), "ragged-batch mismatch"

    print("KERNEL_OK")
</pallas_src>

<mosaic_0001>
module attributes {stable_mosaic.version = 11 : i64} {
  func.func @_mlp2_kernel(%arg0: i32, %arg1: memref<8x784xf32, #tpu.memory_space<vmem>>, %arg2: memref<784x32xbf16, #tpu.memory_space<vmem>>, %arg3: memref<1x32xf32, #tpu.memory_space<vmem>>, %arg4: memref<32x32xbf16, #tpu.memory_space<vmem>>, %arg5: memref<1x32xf32, #tpu.memory_space<vmem>>, %arg6: memref<32x128xbf16, #tpu.memory_space<vmem>>, %arg7: memref<1x128xf32, #tpu.memory_space<vmem>>, %arg8: memref<8x128xf32, #tpu.memory_space<vmem>>) attributes {dimension_semantics = [#tpu.dimension_semantics<parallel>], iteration_bounds = array<i64: 1>, scalar_prefetch = 0 : i64, scratch_operands = 0 : i64, tpu.core_type = #tpu.core_type<tc>, window_params = [{transform_indices = @transform_0, window_bounds = array<i64: 8, 784>}, {pipeline_mode = #tpu.pipeline_mode<synchronous>, transform_indices = @transform_1, window_bounds = array<i64: 784, 32>}, {pipeline_mode = #tpu.pipeline_mode<synchronous>, transform_indices = @transform_2, window_bounds = array<i64: 1, 32>}, {pipeline_mode = #tpu.pipeline_mode<synchronous>, transform_indices = @transform_3, window_bounds = array<i64: 32, 32>}, {pipeline_mode = #tpu.pipeline_mode<synchronous>, transform_indices = @transform_4, window_bounds = array<i64: 1, 32>}, {pipeline_mode = #tpu.pipeline_mode<synchronous>, transform_indices = @transform_5, window_bounds = array<i64: 32, 128>}, {pipeline_mode = #tpu.pipeline_mode<synchronous>, transform_indices = @transform_6, window_bounds = array<i64: 1, 128>}, {transform_indices = @transform_7, window_bounds = array<i64: 8, 128>}]} {
    %c0 = arith.constant 0 : index
    %c0_0 = arith.constant 0 : index
    %0 = vector.load %arg1[%c0, %c0_0] : memref<8x784xf32, #tpu.memory_space<vmem>>, vector<8x784xf32>
    %1 = arith.truncf %0 : vector<8x784xf32> to vector<8x784xbf16>
    %c0_1 = arith.constant 0 : index
    %c0_2 = arith.constant 0 : index
    %2 = vector.load %arg2[%c0_1, %c0_2] : memref<784x32xbf16, #tpu.memory_space<vmem>>, vector<784x32xbf16>
    %cst = arith.constant dense<0.000000e+00> : vector<8x32xf32>
    %3 = tpu.matmul %1, %2, %cst {dimension_numbers = #tpu.dot_dimension_numbers<[1], [0], [0], [1], [0, 0, 1, 1], [], []>} : vector<8x784xbf16>, vector<784x32xbf16>, vector<8x32xf32> -> vector<8x32xf32>
    %c0_3 = arith.constant 0 : index
    %c0_4 = arith.constant 0 : index
    %4 = vector.load %arg3[%c0_3, %c0_4] : memref<1x32xf32, #tpu.memory_space<vmem>>, vector<1x32xf32>
    %5 = vector.broadcast %4 : vector<1x32xf32> to vector<8x32xf32>
    %6 = arith.addf %3, %5 : vector<8x32xf32>
    %7 = arith.negf %6 : vector<8x32xf32>
    %8 = math.exp %7 : vector<8x32xf32>
    %cst_5 = arith.constant 1.000000e+00 : f32
    %9 = vector.broadcast %cst_5 : f32 to vector<8x32xf32>
    %10 = arith.addf %9, %8 : vector<8x32xf32>
    %11 = arith.divf %9, %10 : vector<8x32xf32>
    %12 = arith.truncf %11 : vector<8x32xf32> to vector<8x32xbf16>
    %c0_6 = arith.constant 0 : index
    %c0_7 = arith.constant 0 : index
    %13 = vector.load %arg4[%c0_6, %c0_7] : memref<32x32xbf16, #tpu.memory_space<vmem>>, vector<32x32xbf16>
    %cst_8 = arith.constant dense<0.000000e+00> : vector<8x32xf32>
    %14 = tpu.matmul %12, %13, %cst_8 {dimension_numbers = #tpu.dot_dimension_numbers<[1], [0], [0], [1], [0, 0, 1, 1], [], []>} : vector<8x32xbf16>, vector<32x32xbf16>, vector<8x32xf32> -> vector<8x32xf32>
    %c0_9 = arith.constant 0 : index
    %c0_10 = arith.constant 0 : index
    %15 = vector.load %arg5[%c0_9, %c0_10] : memref<1x32xf32, #tpu.memory_space<vmem>>, vector<1x32xf32>
    %16 = vector.broadcast %15 : vector<1x32xf32> to vector<8x32xf32>
    %17 = arith.addf %14, %16 : vector<8x32xf32>
    %18 = arith.negf %17 : vector<8x32xf32>
    %19 = math.exp %18 : vector<8x32xf32>
    %cst_11 = arith.constant 1.000000e+00 : f32
    %20 = vector.broadcast %cst_11 : f32 to vector<8x32xf32>
    %21 = arith.addf %20, %19 : vector<8x32xf32>
    %22 = arith.divf %20, %21 : vector<8x32xf32>
    %23 = arith.truncf %22 : vector<8x32xf32> to vector<8x32xbf16>
    %c0_12 = arith.constant 0 : index
    %c0_13 = arith.constant 0 : index
    %24 = vector.load %arg6[%c0_12, %c0_13] : memref<32x128xbf16, #tpu.memory_space<vmem>>, vector<32x128xbf16>
    %cst_14 = arith.constant dense<0.000000e+00> : vector<8x128xf32>
    %25 = tpu.matmul %23, %24, %cst_14 {dimension_numbers = #tpu.dot_dimension_numbers<[1], [0], [0], [1], [0, 0, 1, 1], [], []>} : vector<8x32xbf16>, vector<32x128xbf16>, vector<8x128xf32> -> vector<8x128xf32>
    %c0_15 = arith.constant 0 : index
    %c0_16 = arith.constant 0 : index
    %26 = vector.load %arg7[%c0_15, %c0_16] : memref<1x128xf32, #tpu.memory_space<vmem>>, vector<1x128xf32>
    %27 = vector.broadcast %26 : vector<1x128xf32> to vector<8x128xf32>
    %28 = arith.addf %25, %27 : vector<8x128xf32>
    %cst_17 = arith.constant dense<0xFF800000> : vector<8xf32>
    %29 = vector.multi_reduction <maximumf>, %28, %cst_17 [1] : vector<8x128xf32> to vector<8xf32>
    %30 = vector.shape_cast %29 : vector<8xf32> to vector<8x1xf32>
    %31 = vector.broadcast %30 : vector<8x1xf32> to vector<8x128xf32>
    %32 = arith.subf %28, %31 : vector<8x128xf32>
    %33 = math.exp %32 : vector<8x128xf32>
    %cst_18 = arith.constant dense<0.000000e+00> : vector<8xf32>
    %34 = vector.multi_reduction <add>, %33, %cst_18 [1] : vector<8x128xf32> to vector<8xf32>
    %35 = vector.shape_cast %34 : vector<8xf32> to vector<8x1xf32>
    %36 = math.log %35 : vector<8x1xf32>
    %37 = vector.broadcast %36 : vector<8x1xf32> to vector<8x128xf32>
    %38 = arith.subf %32, %37 : vector<8x128xf32>
    %c0_19 = arith.constant 0 : index
    %c0_20 = arith.constant 0 : index
    %39 = vector.load %arg8[%c0_19, %c0_20] : memref<8x128xf32, #tpu.memory_space<vmem>>, vector<8x128xf32>
    tpu.vector_store %arg8[%c0_19, %c0_20], %38 {strides = array<i32>} : memref<8x128xf32, #tpu.memory_space<vmem>>, vector<8x128xf32>,
    return
  }
  func.func @transform_0(%arg0: i32) -> (i32, i32) {
    %c0_i32 = arith.constant 0 : i32
    %c0_i32_0 = arith.constant 0 : i32
    return %arg0, %c0_i32 : i32, i32
  }
  func.func @transform_1(%arg0: i32) -> (i32, i32) {
    %c0_i32 = arith.constant 0 : i32
    %c0_i32_0 = arith.constant 0 : i32
    %c0_i32_1 = arith.constant 0 : i32
    return %c0_i32, %c0_i32_0 : i32, i32
  }
  func.func @transform_2(%arg0: i32) -> (i32, i32) {
    %c0_i32 = arith.constant 0 : i32
    %c0_i32_0 = arith.constant 0 : i32
    %c0_i32_1 = arith.constant 0 : i32
    return %c0_i32, %c0_i32_0 : i32, i32
  }
  func.func @transform_3(%arg0: i32) -> (i32, i32) {
    %c0_i32 = arith.constant 0 : i32
    %c0_i32_0 = arith.constant 0 : i32
    %c0_i32_1 = arith.constant 0 : i32
    return %c0_i32, %c0_i32_0 : i32, i32
  }
  func.func @transform_4(%arg0: i32) -> (i32, i32) {
    %c0_i32 = arith.constant 0 : i32
    %c0_i32_0 = arith.constant 0 : i32
    %c0_i32_1 = arith.constant 0 : i32
    return %c0_i32, %c0_i32_0 : i32, i32
  }
  func.func @transform_5(%arg0: i32) -> (i32, i32) {
    %c0_i32 = arith.constant 0 : i32
    %c0_i32_0 = arith.constant 0 : i32
    %c0_i32_1 = arith.constant 0 : i32
    return %c0_i32, %c0_i32_0 : i32, i32
  }
  func.func @transform_6(%arg0: i32) -> (i32, i32) {
    %c0_i32 = arith.constant 0 : i32
    %c0_i32_0 = arith.constant 0 : i32
    %c0_i32_1 = arith.constant 0 : i32
    return %c0_i32, %c0_i32_0 : i32, i32
  }
  func.func @transform_7(%arg0: i32) -> (i32, i32) {
    %c0_i32 = arith.constant 0 : i32
    %c0_i32_0 = arith.constant 0 : i32
    return %arg0, %c0_i32 : i32, i32
  }
}

</mosaic_0001>

<llo_original>
// kernel: tpu_custom_call.1
$region0: #{tpu_custom_call.1}
  #allocation0 [shape = 'u32[]', space=smem, size = 0x4, offset = 0x4, fixed_abs, tag = 'smem constant byte address 0x4 - core index']
  #allocation1 [shape = 'u32[144,128]{1,0:T(1,128)}', space=vmem, size = 0x12000, scoped, tag = 'internal scratch']
  %s0 = inlined_call_operand.hbm [shape: f32[8,784], index: 0, kind: input, shape index: {}]
  %s1 = inlined_call_operand.hbm [shape: bf16[784,32], index: 1, kind: input, shape index: {}]
  %s2 = inlined_call_operand.hbm [shape: f32[1,32], index: 2, kind: input, shape index: {}]
  %s3 = inlined_call_operand.hbm [shape: bf16[32,32], index: 3, kind: input, shape index: {}]
  %s4 = inlined_call_operand.hbm [shape: f32[1,32], index: 4, kind: input, shape index: {}]
  %s5 = inlined_call_operand.hbm [shape: bf16[32,128], index: 5, kind: input, shape index: {}]
  %s6 = inlined_call_operand.hbm [shape: f32[1,128], index: 6, kind: input, shape index: {}]
  %s7 = inlined_call_operand.hbm [shape: f32[8,128], index: 7, kind: output, shape index: {}]
  %s8 = sld [smem:[#allocation0]]
  $region66: #{tpu_custom_call.1} parent=0
    _
  %s10 = ssub.s32 1, %s8
  %s11 = scalar_select 0, %s10, %s8
  $region1: #{tpu_custom_call.1} parent=0
    #allocation2 [shape = 'u8[28672]{0}', space=vmem, size = 0x7000, scoped, tag = 'input window, operand 0, single buffered']
    #allocation3 [shape = 's32[1]{0}', space=sflag, size = 0x4, scoped, tag = 'scoped memory for tpu_custom_call.1']
    #allocation4 [shape = 's32[1]{0}', space=sflag, size = 0x4, scoped, tag = 'scoped memory for tpu_custom_call.1']
    #allocation5 [shape = 'u8[200704]{0}', space=vmem, size = 0x31000, scoped, tag = 'input window, operand 1, single buffered']
    #allocation6 [shape = 's32[1]{0}', space=sflag, size = 0x4, scoped, tag = 'scoped memory for tpu_custom_call.1']
    #allocation7 [shape = 'u8[512]{0}', space=vmem, size = 0x400, scoped, tag = 'input window, operand 2, single buffered']
    #allocation8 [shape = 'u8[8192]{0}', space=vmem, size = 0x2000, scoped, tag = 'input window, operand 3, single buffered']
    #allocation9 [shape = 's32[1]{0}', space=sflag, size = 0x4, scoped, tag = 'scoped memory for tpu_custom_call.1']
    #allocation10 [shape = 'u8[512]{0}', space=vmem, size = 0x400, scoped, tag = 'input window, operand 4, single buffered']
    #allocation11 [shape = 'u8[8192]{0}', space=vmem, size = 0x2000, scoped, tag = 'input window, operand 5, single buffered']
    #allocation12 [shape = 's32[1]{0}', space=sflag, size = 0x4, scoped, tag = 'scoped memory for tpu_custom_call.1']
    #allocation13 [shape = 'u8[512]{0}', space=vmem, size = 0x400, scoped, tag = 'input window, operand 6, single buffered']
    #allocation14 [shape = 'u8[4096]{0}', space=vmem, size = 0x1000, scoped, tag = 'output window, operand 0, single buffered']
    %12 = vsyncpa [#allocation3], 0
    %13 = vsyncpa [#allocation6], 0
    %14 = vsyncpa [#allocation9], 0
    %15 = vsyncpa [#allocation12], 0
    %16 = vsyncpa [#allocation4], 0
    // Predicated region
    $region2: #{tpu_custom_call.1} parent=1 // pred_check
      _
    $region3: #{tpu_custom_call.1} parent=1 // pred_check_branch
      %18 = sbr.rel (0) target = $region5
    $region4: #{tpu_custom_call.1} parent=1 // pred_region
      %s20 = ssub.s32 896, 896
      %21 = vsyncadd [#allocation3], %s20
      %s23 = sshll.u32 [#allocation2], 4
      %s24 = int_to_ptr.vmem [resolvable:$true] %s23
      %26 = dma.hbm_to_vmem [thread:$0]  %s0, 896, %s24, [#allocation3]
    $region5: #{tpu_custom_call.1} parent=1 // pred_fallthru
      _
    // Predicated region
    $region6: #{tpu_custom_call.1} parent=1 // pred_check
      _
    $region7: #{tpu_custom_call.1} parent=1 // pred_check_branch
      %28 = sbr.rel (0) target = $region9
    $region8: #{tpu_custom_call.1} parent=1 // pred_region
      %s30 = ssub.s32 6272, 6272
      %31 = vsyncadd [#allocation6], %s30
      %s32 = sshll.u32 [#allocation5], 4
      %s33 = int_to_ptr.vmem [resolvable:$true] %s32
      %38 = dma.hbm_to_vmem [thread:$0]  %s1, 6272, %s33, [#allocation6], 64, 64, 4
    $region9: #{tpu_custom_call.1} parent=1 // pred_fallthru
      _
    // Predicated region
    $region10: #{tpu_custom_call.1} parent=1 // pred_check
      _
    $region11: #{tpu_custom_call.1} parent=1 // pred_check_branch
      %40 = sbr.rel (0) target = $region13
    $region12: #{tpu_custom_call.1} parent=1 // pred_region
      %s42 = ssub.s32 16, 16
      %43 = vsyncadd [#allocation6], %s42
      %s45 = sshll.u32 [#allocation7], 4
      %s46 = int_to_ptr.vmem [resolvable:$true] %s45
      %48 = dma.hbm_to_vmem [thread:$0]  %s2, 16, %s46, [#allocation6]
    $region13: #{tpu_custom_call.1} parent=1 // pred_fallthru
      _
    // Predicated region
    $region14: #{tpu_custom_call.1} parent=1 // pred_check
      _
    $region15: #{tpu_custom_call.1} parent=1 // pred_check_branch
      %50 = sbr.rel (0) target = $region17
    $region16: #{tpu_custom_call.1} parent=1 // pred_region
      %s52 = ssub.s32 256, 256
      %53 = vsyncadd [#allocation9], %s52
      %s54 = sshll.u32 [#allocation8], 4
      %s55 = int_to_ptr.vmem [resolvable:$true] %s54
      %60 = dma.hbm_to_vmem [thread:$0]  %s3, 256, %s55, [#allocation9], 64, 64, 4
    $region17: #{tpu_custom_call.1} parent=1 // pred_fallthru
      _
    // Predicated region
    $region18: #{tpu_custom_call.1} parent=1 // pred_check
      _
    $region19: #{tpu_custom_call.1} parent=1 // pred_check_branch
      %62 = sbr.rel (0) target = $region21
    $region20: #{tpu_custom_call.1} parent=1 // pred_region
      %s64 = ssub.s32 16, 16
      %65 = vsyncadd [#allocation9], %s64
      %s67 = sshll.u32 [#allocation10], 4
      %s68 = int_to_ptr.vmem [resolvable:$true] %s67
      %70 = dma.hbm_to_vmem [thread:$0]  %s4, 16, %s68, [#allocation9]
    $region21: #{tpu_custom_call.1} parent=1 // pred_fallthru
      _
    // Predicated region
    $region22: #{tpu_custom_call.1} parent=1 // pred_check
      _
    $region23: #{tpu_custom_call.1} parent=1 // pred_check_branch
      %72 = sbr.rel (0) target = $region25
    $region24: #{tpu_custom_call.1} parent=1 // pred_region
      %s74 = ssub.s32 256, 256
      %75 = vsyncadd [#allocation12], %s74
      %s76 = sshll.u32 [#allocation11], 4
      %s77 = int_to_ptr.vmem [resolvable:$true] %s76
      %82 = dma.hbm_to_vmem [thread:$0]  %s5, 256, %s77, [#allocation12], 64, 64, 4
    $region25: #{tpu_custom_call.1} parent=1 // pred_fallthru
      _
    // Predicated region
    $region26: #{tpu_custom_call.1} parent=1 // pred_check
      _
    $region27: #{tpu_custom_call.1} parent=1 // pred_check_branch
      %84 = sbr.rel (0) target = $region29
    $region28: #{tpu_custom_call.1} parent=1 // pred_region
      %s86 = ssub.s32 16, 16
      %87 = vsyncadd [#allocation12], %s86
      %s89 = sshll.u32 [#allocation13], 4
      %s90 = int_to_ptr.vmem [resolvable:$true] %s89
      %92 = dma.hbm_to_vmem [thread:$0]  %s6, 16, %s90, [#allocation12]
    $region29: #{tpu_custom_call.1} parent=1 // pred_fallthru
      _
    // Predicated region
    $region30: #{tpu_custom_call.1} parent=1 // pred_check
      _
    $region31: #{tpu_custom_call.1} parent=1 // pred_check_branch
      %94 = sbr.rel (0) target = $region33
    $region32: #{tpu_custom_call.1} parent=1 // pred_region
      %95 = dma.done [#allocation3], 896
    $region33: #{tpu_custom_call.1} parent=1 // pred_fallthru
      _
    // Predicated region
    $region34: #{tpu_custom_call.1} parent=1 // pred_check
      _
    $region35: #{tpu_custom_call.1} parent=1 // pred_check_branch
      %97 = sbr.rel (0) target = $region37
    $region36: #{tpu_custom_call.1} parent=1 // pred_region
      %98 = dma.done [#allocation6], 6272
    $region37: #{tpu_custom_call.1} parent=1 // pred_fallthru
      _
    // Predicated region
    $region38: #{tpu_custom_call.1} parent=1 // pred_check
      _
    $region39: #{tpu_custom_call.1} parent=1 // pred_check_branch
      %100 = sbr.rel (0) target = $region41
    $region40: #{tpu_custom_call.1} parent=1 // pred_region
      %101 = dma.done [#allocation6], 16
    $region41: #{tpu_custom_call.1} parent=1 // pred_fallthru
      _
    // Predicated region
    $region42: #{tpu_custom_call.1} parent=1 // pred_check
      _
    $region43: #{tpu_custom_call.1} parent=1 // pred_check_branch
      %103 = sbr.rel (0) target = $region45
    $region44: #{tpu_custom_call.1} parent=1 // pred_region
      %104 = dma.done [#allocation9], 256
    $region45: #{tpu_custom_call.1} parent=1 // pred_fallthru
      _
    // Predicated region
    $region46: #{tpu_custom_call.1} parent=1 // pred_check
      _
    $region47: #{tpu_custom_call.1} parent=1 // pred_check_branch
      %106 = sbr.rel (0) target = $region49
    $region48: #{tpu_custom_call.1} parent=1 // pred_region
      %107 = dma.done [#allocation9], 16
    $region49: #{tpu_custom_call.1} parent=1 // pred_fallthru
      _
    // Predicated region
    $region50: #{tpu_custom_call.1} parent=1 // pred_check
      _
    $region51: #{tpu_custom_call.1} parent=1 // pred_check_branch
      %109 = sbr.rel (0) target = $region53
    $region52: #{tpu_custom_call.1} parent=1 // pred_region
      %110 = dma.done [#allocation12], 256
    $region53: #{tpu_custom_call.1} parent=1 // pred_fallthru
      _
    // Predicated region
    $region54: #{tpu_custom_call.1} parent=1 // pred_check
      _
    $region55: #{tpu_custom_call.1} parent=1 // pred_check_branch
      %112 = sbr.rel (0) target = $region57
    $region56: #{tpu_custom_call.1} parent=1 // pred_region
      %113 = dma.done [#allocation12], 16
    $region57: #{tpu_custom_call.1} parent=1 // pred_fallthru
      _
    %v115 = vld [vmem:[#allocation2] sm:$0xff]
    %v116 = vld [vmem:[#allocation2 + $0x8] sm:$0xff]
    %v117 = vld [vmem:[#allocation2 + $0x10] sm:$0xff]
    %v118 = vld [vmem:[#allocation2 + $0x18] sm:$0xff]
    %v119 = vld [vmem:[#allocation2 + $0x20] sm:$0xff]
    %v120 = vld [vmem:[#allocation2 + $0x28] sm:$0xff]
    %v121 = vld [vmem:[#allocation2 + $0x30] sm:$0xff]
    %v122 = vpack.c.bf16 %v115, %v115
    %v123 = vpack.c.bf16 %v116, %v116
    %v124 = vpack.c.bf16 %v117, %v117
    %v125 = vpack.c.bf16 %v118, %v118
    %v126 = vpack.c.bf16 %v119, %v119
    %v127 = vpack.c.bf16 %v120, %v120
    %v128 = vpack.c.bf16 %v121, %v121
    %v129 = vld [vmem:[#allocation5] sm:$0xf]
    %v130 = vld [vmem:[#allocation5 + $0x4] sm:$0xf]
    %v131 = vld [vmem:[#allocation5 + $0x8] sm:$0xf]
    %v132 = vld [vmem:[#allocation5 + $0xc] sm:$0xf]
    %v133 = vld [vmem:[#allocation5 + $0x10] sm:$0xf]
    %v134 = vld [vmem:[#allocation5 + $0x14] sm:$0xf]
    %v135 = vld [vmem:[#allocation5 + $0x18] sm:$0xf]
    %v136 = vld [vmem:[#allocation5 + $0x1c] sm:$0xf]
    %v137 = vld [vmem:[#allocation5 + $0x20] sm:$0xf]
    %v138 = vld [vmem:[#allocation5 + $0x24] sm:$0xf]
    %v139 = vld [vmem:[#allocation5 + $0x28] sm:$0xf]
    %v140 = vld [vmem:[#allocation5 + $0x2c] sm:$0xf]
    %v141 = vld [vmem:[#allocation5 + $0x30] sm:$0xf]
    %v142 = vld [vmem:[#allocation5 + $0x34] sm:$0xf]
    %v143 = vld [vmem:[#allocation5 + $0x38] sm:$0xf]
    %v144 = vld [vmem:[#allocation5 + $0x3c] sm:$0xf]
    %v145 = vld [vmem:[#allocation5 + $0x40] sm:$0xf]
    %v146 = vld [vmem:[#allocation5 + $0x44] sm:$0xf]
    %v147 = vld [vmem:[#allocation5 + $0x48] sm:$0xf]
    %v148 = vld [vmem:[#allocation5 + $0x4c] sm:$0xf]
    %v149 = vld [vmem:[#allocation5 + $0x50] sm:$0xf]
    %v150 = vld [vmem:[#allocation5 + $0x54] sm:$0xf]
    %v151 = vld [vmem:[#allocation5 + $0x58] sm:$0xf]
    %v152 = vld [vmem:[#allocation5 + $0x5c] sm:$0xf]
    %v153 = vld [vmem:[#allocation5 + $0x60] sm:$0xf]
    %v154 = vld [vmem:[#allocation5 + $0x64] sm:$0xf]
    %v155 = vld [vmem:[#allocation5 + $0x68] sm:$0xf]
    %v156 = vld [vmem:[#allocation5 + $0x6c] sm:$0xf]
    %v157 = vld [vmem:[#allocation5 + $0x70] sm:$0xf]
    %v158 = vld [vmem:[#allocation5 + $0x74] sm:$0xf]
    %v159 = vld [vmem:[#allocation5 + $0x78] sm:$0xf]
    %v160 = vld [vmem:[#allocation5 + $0x7c] sm:$0xf]
    %v161 = vld [vmem:[#allocation5 + $0x80] sm:$0xf]
    %v162 = vld [vmem:[#allocation5 + $0x84] sm:$0xf]
    %v163 = vld [vmem:[#allocation5 + $0x88] sm:$0xf]
    %v164 = vld [vmem:[#allocation5 + $0x8c] sm:$0xf]
    %v165 = vld [vmem:[#allocation5 + $0x90] sm:$0xf]
    %v166 = vld [vmem:[#allocation5 + $0x94] sm:$0xf]
    %v167 = vld [vmem:[#allocation5 + $0x98] sm:$0xf]
    %v168 = vld [vmem:[#allocation5 + $0x9c] sm:$0xf]
    %v169 = vld [vmem:[#allocation5 + $0xa0] sm:$0xf]
    %v170 = vld [vmem:[#allocation5 + $0xa4] sm:$0xf]
    %v171 = vld [vmem:[#allocation5 + $0xa8] sm:$0xf]
    %v172 = vld [vmem:[#allocation5 + $0xac] sm:$0xf]
    %v173 = vld [vmem:[#allocation5 + $0xb0] sm:$0xf]
    %v174 = vld [vmem:[#allocation5 + $0xb4] sm:$0xf]
    %v175 = vld [vmem:[#allocation5 + $0xb8] sm:$0xf]
    %v176 = vld [vmem:[#allocation5 + $0xbc] sm:$0xf]
    %v177 = vld [vmem:[#allocation5 + $0xc0] sm:$0xf]
    %v178 = vld [vmem:[#allocation5 + $0xc4] sm:$0xf]
    %v179 = vld [vmem:[#allocation5 + $0xc8] sm:$0xf]
    %v180 = vld [vmem:[#allocation5 + $0xcc] sm:$0xf]
    %v181 = vld [vmem:[#allocation5 + $0xd0] sm:$0xf]
    %v182 = vld [vmem:[#allocation5 + $0xd4] sm:$0xf]
    %v183 = vld [vmem:[#allocation5 + $0xd8] sm:$0xf]
    %v184 = vld [vmem:[#allocation5 + $0xdc] sm:$0xf]
    %v185 = vld [vmem:[#allocation5 + $0xe0] sm:$0xf]
    %v186 = vld [vmem:[#allocation5 + $0xe4] sm:$0xf]
    %v187 = vld [vmem:[#allocation5 + $0xe8] sm:$0xf]
    %v188 = vld [vmem:[#allocation5 + $0xec] sm:$0xf]
    %v189 = vld [vmem:[#allocation5 + $0xf0] sm:$0xf]
    %v190 = vld [vmem:[#allocation5 + $0xf4] sm:$0xf]
    %v191 = vld [vmem:[#allocation5 + $0xf8] sm:$0xf]
    %v192 = vld [vmem:[#allocation5 + $0xfc] sm:$0xf]
    %v193 = vld [vmem:[#allocation5 + $0x100] sm:$0xf]
    %v194 = vld [vmem:[#allocation5 + $0x104] sm:$0xf]
    %v195 = vld [vmem:[#allocation5 + $0x108] sm:$0xf]
    %v196 = vld [vmem:[#allocation5 + $0x10c] sm:$0xf]
    %v197 = vld [vmem:[#allocation5 + $0x110] sm:$0xf]
    %v198 = vld [vmem:[#allocation5 + $0x114] sm:$0xf]
    %v199 = vld [vmem:[#allocation5 + $0x118] sm:$0xf]
    %v200 = vld [vmem:[#allocation5 + $0x11c] sm:$0xf]
    %v201 = vld [vmem:[#allocation5 + $0x120] sm:$0xf]
    %v202 = vld [vmem:[#allocation5 + $0x124] sm:$0xf]
    %v203 = vld [vmem:[#allocation5 + $0x128] sm:$0xf]
    %v204 = vld [vmem:[#allocation5 + $0x12c] sm:$0xf]
    %v205 = vld [vmem:[#allocation5 + $0x130] sm:$0xf]
    %v206 = vld [vmem:[#allocation5 + $0x134] sm:$0xf]
    %v207 = vld [vmem:[#allocation5 + $0x138] sm:$0xf]
    %v208 = vld [vmem:[#allocation5 + $0x13c] sm:$0xf]
    %v209 = vld [vmem:[#allocation5 + $0x140] sm:$0xf]
    %v210 = vld [vmem:[#allocation5 + $0x144] sm:$0xf]
    %v211 = vld [vmem:[#allocation5 + $0x148] sm:$0xf]
    %v212 = vld [vmem:[#allocation5 + $0x14c] sm:$0xf]
    %v213 = vld [vmem:[#allocation5 + $0x150] sm:$0xf]
    %v214 = vld [vmem:[#allocation5 + $0x154] sm:$0xf]
    %v215 = vld [vmem:[#allocation5 + $0x158] sm:$0xf]
    %v216 = vld [vmem:[#allocation5 + $0x15c] sm:$0xf]
    %v217 = vld [vmem:[#allocation5 + $0x160] sm:$0xf]
    %v218 = vld [vmem:[#allocation5 + $0x164] sm:$0xf]
    %v219 = vld [vmem:[#allocation5 + $0x168] sm:$0xf]
    %v220 = vld [vmem:[#allocation5 + $0x16c] sm:$0xf]
    %v221 = vld [vmem:[#allocation5 + $0x170] sm:$0xf]
    %v222 = vld [vmem:[#allocation5 + $0x174] sm:$0xf]
    %v223 = vld [vmem:[#allocation5 + $0x178] sm:$0xf]
    %v224 = vld [vmem:[#allocation5 + $0x17c] sm:$0xf]
    %v225 = vld [vmem:[#allocation5 + $0x180] sm:$0xf]
    %v226 = vld [vmem:[#allocation5 + $0x184] sm:$0xf]
    %v227 = vld [vmem:[#allocation7] sm:$0x1]
    %v229 = vlaneseq
    %v230 = vshrl.u32 %v229, 7
    %v231 = vsub.s32 0, %v230
    %v232 = vrot.slane %v227, %v231
    %v332 = vunpack.c.l.b16 %v129
    %v333 = vunpack.c.l.b16 %v130
    %v334 = vunpack.c.l.b16 %v131
    %v335 = vunpack.c.l.b16 %v132
    %v336 = vunpack.c.l.b16 %v133
    %v337 = vunpack.c.l.b16 %v134
    %v338 = vunpack.c.l.b16 %v135
    %v339 = vunpack.c.l.b16 %v136
    %v340 = vunpack.c.l.b16 %v137
    %v341 = vunpack.c.l.b16 %v138
    %v342 = vunpack.c.l.b16 %v139
    %v343 = vunpack.c.l.b16 %v140
    %v344 = vunpack.c.l.b16 %v141
    %v345 = vunpack.c.l.b16 %v142
    %v346 = vunpack.c.l.b16 %v143
    %v347 = vunpack.c.l.b16 %v144
    %v348 = vunpack.c.l.b16 %v145
    %v349 = vunpack.c.l.b16 %v146
    %v350 = vunpack.c.l.b16 %v147
    %v351 = vunpack.c.l.b16 %v148
    %v352 = vunpack.c.l.b16 %v149
    %v353 = vunpack.c.l.b16 %v150
    %v354 = vunpack.c.l.b16 %v151
    %v355 = vunpack.c.l.b16 %v152
    %v356 = vunpack.c.l.b16 %v153
    %v357 = vunpack.c.l.b16 %v154
    %v358 = vunpack.c.l.b16 %v155
    %v359 = vunpack.c.l.b16 %v156
    %v360 = vunpack.c.l.b16 %v157
    %v361 = vunpack.c.l.b16 %v158
    %v362 = vunpack.c.l.b16 %v159
    %v363 = vunpack.c.l.b16 %v160
    %v364 = vunpack.c.l.b16 %v161
    %v365 = vunpack.c.l.b16 %v162
    %v366 = vunpack.c.l.b16 %v163
    %v367 = vunpack.c.l.b16 %v164
    %v368 = vunpack.c.l.b16 %v165
    %v369 = vunpack.c.l.b16 %v166
    %v370 = vunpack.c.l.b16 %v167
    %v371 = vunpack.c.l.b16 %v168
    %v372 = vunpack.c.l.b16 %v169
    %v373 = vunpack.c.l.b16 %v170
    %v374 = vunpack.c.l.b16 %v171
    %v375 = vunpack.c.l.b16 %v172
    %v376 = vunpack.c.l.b16 %v173
    %v377 = vunpack.c.l.b16 %v174
    %v378 = vunpack.c.l.b16 %v175
    %v379 = vunpack.c.l.b16 %v176
    %v380 = vunpack.c.l.b16 %v177
    %v381 = vunpack.c.l.b16 %v178
    %v382 = vunpack.c.l.b16 %v179
    %v383 = vunpack.c.l.b16 %v180
    %v384 = vunpack.c.l.b16 %v181
    %v385 = vunpack.c.l.b16 %v182
    %v386 = vunpack.c.l.b16 %v183
    %v387 = vunpack.c.l.b16 %v184
    %v388 = vunpack.c.l.b16 %v185
    %v389 = vunpack.c.l.b16 %v186
    %v390 = vunpack.c.l.b16 %v187
    %v391 = vunpack.c.l.b16 %v188
    %v392 = vunpack.c.l.b16 %v189
    %v393 = vunpack.c.l.b16 %v190
    %v394 = vunpack.c.l.b16 %v191
    %v395 = vunpack.c.l.b16 %v192
    %v396 = vunpack.c.l.b16 %v193
    %v397 = vunpack.c.l.b16 %v194
    %v398 = vunpack.c.l.b16 %v195
    %v399 = vunpack.c.l.b16 %v196
    %v400 = vunpack.c.l.b16 %v197
    %v401 = vunpack.c.l.b16 %v198
    %v402 = vunpack.c.l.b16 %v199
    %v403 = vunpack.c.l.b16 %v200
    %v404 = vunpack.c.l.b16 %v201
    %v405 = vunpack.c.l.b16 %v202
    %v406 = vunpack.c.l.b16 %v203
    %v407 = vunpack.c.l.b16 %v204
    %v408 = vunpack.c.l.b16 %v205
    %v409 = vunpack.c.l.b16 %v206
    %v410 = vunpack.c.l.b16 %v207
    %v411 = vunpack.c.l.b16 %v208
    %v412 = vunpack.c.l.b16 %v209
    %v413 = vunpack.c.l.b16 %v210
    %v414 = vunpack.c.l.b16 %v211
    %v415 = vunpack.c.l.b16 %v212
    %v416 = vunpack.c.l.b16 %v213
    %v417 = vunpack.c.l.b16 %v214
    %v418 = vunpack.c.l.b16 %v215
    %v419 = vunpack.c.l.b16 %v216
    %v420 = vunpack.c.l.b16 %v217
    %v421 = vunpack.c.l.b16 %v218
    %v422 = vunpack.c.l.b16 %v219
    %v423 = vunpack.c.l.b16 %v220
    %v424 = vunpack.c.l.b16 %v221
    %v425 = vunpack.c.l.b16 %v222
    %v426 = vunpack.c.l.b16 %v223
    %v427 = vunpack.c.l.b16 %v224
    %v428 = vunpack.c.l.b16 %v225
    %v429 = vunpack.c.l.b16 %v226
    %v430 = vpack.c.b16 %v333, %v332
    %v431 = vpack.c.b16 %v335, %v334
    %v432 = vpack.c.b16 %v337, %v336
    %v433 = vpack.c.b16 %v339, %v338
    %v434 = vpack.c.b16 %v341, %v340
    %v435 = vpack.c.b16 %v343, %v342
    %v436 = vpack.c.b16 %v345, %v344
    %v437 = vpack.c.b16 %v347, %v346
    %v438 = vpack.c.b16 %v349, %v348
    %v439 = vpack.c.b16 %v351, %v350
    %v440 = vpack.c.b16 %v353, %v352
    %v441 = vpack.c.b16 %v355, %v354
    %v442 = vpack.c.b16 %v357, %v356
    %v443 = vpack.c.b16 %v359, %v358
    %v444 = vpack.c.b16 %v361, %v360
    %v445 = vpack.c.b16 %v363, %v362
    %v446 = vpack.c.b16 %v365, %v364
    %v447 = vpack.c.b16 %v367, %v366
    %v448 = vpack.c.b16 %v369, %v368
    %v449 = vpack.c.b16 %v371, %v370
    %v450 = vpack.c.b16 %v373, %v372
    %v451 = vpack.c.b16 %v375, %v374
    %v452 = vpack.c.b16 %v377, %v376
    %v453 = vpack.c.b16 %v379, %v378
    %v454 = vpack.c.b16 %v381, %v380
    %v455 = vpack.c.b16 %v383, %v382
    %v456 = vpack.c.b16 %v385, %v384
    %v457 = vpack.c.b16 %v387, %v386
    %v458 = vpack.c.b16 %v389, %v388
    %v459 = vpack.c.b16 %v391, %v390
    %v460 = vpack.c.b16 %v393, %v392
    %v461 = vpack.c.b16 %v395, %v394
    %v462 = vpack.c.b16 %v397, %v396
    %v463 = vpack.c.b16 %v399, %v398
    %v464 = vpack.c.b16 %v401, %v400
    %v465 = vpack.c.b16 %v403, %v402
    %v466 = vpack.c.b16 %v405, %v404
    %v467 = vpack.c.b16 %v407, %v406
    %v468 = vpack.c.b16 %v409, %v408
    %v469 = vpack.c.b16 %v411, %v410
    %v470 = vpack.c.b16 %v413, %v412
    %v471 = vpack.c.b16 %v415, %v414
    %v472 = vpack.c.b16 %v417, %v416
    %v473 = vpack.c.b16 %v419, %v418
    %v474 = vpack.c.b16 %v421, %v420
    %v475 = vpack.c.b16 %v423, %v422
    %v476 = vpack.c.b16 %v425, %v424
    %v477 = vpack.c.b16 %v427, %v426
    %v478 = vpack.c.b16 %v429, %v428
    %vm528 = vcmask 130048
    %v530 = vsel %vm528, %v128, 0
    %532 = vmatprep.subr.bf16.mxu0 0
    %533 = vmatpush1.bf16.msra.mxu0 %v430
    %534 = vmatprep.subr.bf16.mxu0 0
    %535 = vmatpush1.bf16.msra.mxu0 %v431
    %536 = vmatprep.subr.bf16.mxu0 0
    %537 = vmatpush1.bf16.msra.mxu0 %v432
    %538 = vmatprep.subr.bf16.mxu0 0
    %539 = vmatpush1.bf16.msra.mxu0 %v433
    %540 = vmatprep.subr.bf16.mxu0 0
    %541 = vmatpush1.bf16.msra.mxu0 %v434
    %542 = vmatprep.subr.bf16.mxu0 0
    %543 = vmatpush1.bf16.msra.mxu0 %v435
    %544 = vmatprep.subr.bf16.mxu0 0
    %545 = vmatpush1.bf16.msra.mxu0 %v436
    %546 = vmatprep.subr.bf16.mxu0 0
    %547 = vmatpush1.bf16.msra.mxu0 %v437
    %548 = vmatprep.subr.bf16.mxu0 0
    %549 = vmatpush1.bf16.msra.mxu0 %v438
    %550 = vmatprep.subr.bf16.mxu0 0
    %551 = vmatpush1.bf16.msra.mxu0 %v439
    %552 = vmatprep.subr.bf16.mxu0 0
    %553 = vmatpush1.bf16.msra.mxu0 %v440
    %554 = vmatprep.subr.bf16.mxu0 0
    %555 = vmatpush1.bf16.msra.mxu0 %v441
    %556 = vmatprep.subr.bf16.mxu0 0
    %557 = vmatpush1.bf16.msra.mxu0 %v442
    %558 = vmatprep.subr.bf16.mxu0 0
    %559 = vmatpush1.bf16.msra.mxu0 %v443
    %560 = vmatprep.subr.bf16.mxu0 0
    %561 = vmatpush1.bf16.msra.mxu0 %v444
    %562 = vmatprep.subr.bf16.mxu0 0
    %563 = vmatpush1.bf16.msra.mxu0 %v445
    %564 = vmatprep.mubr.bf16.mxu0 %v123
    %565 = vmatmul.mubr.bf16.gmra.mrb[0].mxu0 %v122
    %v566 = vpop.f32.mrb[0].mxu0
    %v567 = vadd.f32 %v232, %v566
    %v568 = vpop.f32.mrb[0].mxu0
    %v569 = vpop.f32.mrb[0].mxu0
    %v570 = vpop.f32.mrb[0].mxu0
    %571 = vdwg.mxu0
    %572 = vmatprep.subr.bf16.mxu0 0
    %573 = vmatpush1.bf16.msra.mxu0 %v446
    %574 = vmatprep.subr.bf16.mxu0 0
    %575 = vmatpush1.bf16.msra.mxu0 %v447
    %576 = vmatprep.subr.bf16.mxu0 0
    %577 = vmatpush1.bf16.msra.mxu0 %v448
    %578 = vmatprep.subr.bf16.mxu0 0
    %579 = vmatpush1.bf16.msra.mxu0 %v449
    %580 = vmatprep.subr.bf16.mxu0 0
    %581 = vmatpush1.bf16.msra.mxu0 %v450
    %582 = vmatprep.subr.bf16.mxu0 0
    %583 = vmatpush1.bf16.msra.mxu0 %v451
    %584 = vmatprep.subr.bf16.mxu0 0
    %585 = vmatpush1.bf16.msra.mxu0 %v452
    %586 = vmatprep.subr.bf16.mxu0 0
    %587 = vmatpush1.bf16.msra.mxu0 %v453
    %588 = vmatprep.subr.bf16.mxu0 0
    %589 = vmatpush1.bf16.msra.mxu0 %v454
    %590 = vmatprep.subr.bf16.mxu0 0
    %591 = vmatpush1.bf16.msra.mxu0 %v455
    %592 = vmatprep.subr.bf16.mxu0 0
    %593 = vmatpush1.bf16.msra.mxu0 %v456
    %594 = vmatprep.subr.bf16.mxu0 0
    %595 = vmatpush1.bf16.msra.mxu0 %v457
    %596 = vmatprep.subr.bf16.mxu0 0
    %597 = vmatpush1.bf16.msra.mxu0 %v458
    %598 = vmatprep.subr.bf16.mxu0 0
    %599 = vmatpush1.bf16.msra.mxu0 %v459
    %600 = vmatprep.subr.bf16.mxu0 0
    %601 = vmatpush1.bf16.msra.mxu0 %v460
    %602 = vmatprep.subr.bf16.mxu0 0
    %603 = vmatpush1.bf16.msra.mxu0 %v461
    %604 = vmatprep.mubr.bf16.mxu0 %v125
    %605 = vmatmul.mubr.bf16.gmra.mrb[0].mxu0 %v124
    %v606 = vpop.f32.mrb[0].mxu0
    %v607 = vadd.f32 %v567, %v606
    %v608 = vpop.f32.mrb[0].mxu0
    %v609 = vpop.f32.mrb[0].mxu0
    %v610 = vpop.f32.mrb[0].mxu0
    %611 = vdwg.mxu0
    %612 = vmatprep.subr.bf16.mxu0 0
    %613 = vmatpush1.bf16.msra.mxu0 %v462
    %614 = vmatprep.subr.bf16.mxu0 0
    %615 = vmatpush1.bf16.msra.mxu0 %v463
    %616 = vmatprep.subr.bf16.mxu0 0
    %617 = vmatpush1.bf16.msra.mxu0 %v464
    %618 = vmatprep.subr.bf16.mxu0 0
    %619 = vmatpush1.bf16.msra.mxu0 %v465
    %620 = vmatprep.subr.bf16.mxu0 0
    %621 = vmatpush1.bf16.msra.mxu0 %v466
    %622 = vmatprep.subr.bf16.mxu0 0
    %623 = vmatpush1.bf16.msra.mxu0 %v467
    %624 = vmatprep.subr.bf16.mxu0 0
    %625 = vmatpush1.bf16.msra.mxu0 %v468
    %626 = vmatprep.subr.bf16.mxu0 0
    %627 = vmatpush1.bf16.msra.mxu0 %v469
    %628 = vmatprep.subr.bf16.mxu0 0
    %629 = vmatpush1.bf16.msra.mxu0 %v470
    %630 = vmatprep.subr.bf16.mxu0 0
    %631 = vmatpush1.bf16.msra.mxu0 %v471
    %632 = vmatprep.subr.bf16.mxu0 0
    %633 = vmatpush1.bf16.msra.mxu0 %v472
    %634 = vmatprep.subr.bf16.mxu0 0
    %635 = vmatpush1.bf16.msra.mxu0 %v473
    %636 = vmatprep.subr.bf16.mxu0 0
    %637 = vmatpush1.bf16.msra.mxu0 %v474
    %638 = vmatprep.subr.bf16.mxu0 0
    %639 = vmatpush1.bf16.msra.mxu0 %v475
    %640 = vmatprep.subr.bf16.mxu0 0
    %641 = vmatpush1.bf16.msra.mxu0 %v476
    %642 = vmatprep.subr.bf16.mxu0 0
    %643 = vmatpush1.bf16.msra.mxu0 %v477
    %644 = vmatprep.mubr.bf16.mxu0 %v127
    %645 = vmatmul.mubr.bf16.gmra.mrb[0].mxu0 %v126
    %v646 = vpop.f32.mrb[0].mxu0
    %v647 = vadd.f32 %v607, %v646
    %v648 = vpop.f32.mrb[0].mxu0
    %v649 = vpop.f32.mrb[0].mxu0
    %v650 = vpop.f32.mrb[0].mxu0
    %651 = vdwg.mxu0
    %652 = vmatprep.subr.bf16.mxu0 0
    %653 = vmatpush1.bf16.msra.mxu0 %v478
    %654 = vmatprep.subr.bf16.mxu0 0
    %655 = vmatpush1.bf16.msra.mxu0 0
    %656 = vmatprep.subr.bf16.mxu0 0
    %657 = vmatpush1.bf16.msra.mxu0 0
    %658 = vmatprep.subr.bf16.mxu0 0
    %659 = vmatpush1.bf16.msra.mxu0 0
    %660 = vmatprep.subr.bf16.mxu0 0
    %661 = vmatpush1.bf16.msra.mxu0 0
    %662 = vmatprep.subr.bf16.mxu0 0
    %663 = vmatpush1.bf16.msra.mxu0 0
    %664 = vmatprep.subr.bf16.mxu0 0
    %665 = vmatpush1.bf16.msra.mxu0 0
    %666 = vmatprep.subr.bf16.mxu0 0
    %667 = vmatpush1.bf16.msra.mxu0 0
    %668 = vmatprep.subr.bf16.mxu0 0
    %669 = vmatpush1.bf16.msra.mxu0 0
    %670 = vmatprep.subr.bf16.mxu0 0
    %671 = vmatpush1.bf16.msra.mxu0 0
    %672 = vmatprep.subr.bf16.mxu0 0
    %673 = vmatpush1.bf16.msra.mxu0 0
    %674 = vmatprep.subr.bf16.mxu0 0
    %675 = vmatpush1.bf16.msra.mxu0 0
    %676 = vmatprep.subr.bf16.mxu0 0
    %677 = vmatpush1.bf16.msra.mxu0 0
    %678 = vmatprep.subr.bf16.mxu0 0
    %679 = vmatpush1.bf16.msra.mxu0 0
    %680 = vmatprep.subr.bf16.mxu0 0
    %681 = vmatpush1.bf16.msra.mxu0 0
    %682 = vmatprep.subr.bf16.mxu0 0
    %683 = vmatpush1.bf16.msra.mxu0 0
    %684 = vmatprep.mubr.bf16.mxu0 0
    %685 = vmatmul.mubr.bf16.gmra.mrb[0].mxu0 %v530
    %v686 = vpop.f32.mrb[0].mxu0
    %v687 = vadd.f32 %v647, %v686
    %v688 = vpop.f32.mrb[0].mxu0
    %v689 = vpop.f32.mrb[0].mxu0
    %v690 = vpop.f32.mrb[0].mxu0
    %691 = vdwg.mxu0
    %v692 = vxor.u32 %v687, 2147483648
    %v693 = vmul.f32 %v692, 1.442695
    %v694 = vpow.pop %v693
    %v695 = vadd.f32 %v694, 1.0
    %v696 = vrcp.pop %v695
    %v697 = vmul.f32 1.0, %v696
    %v698 = vpack.c.bf16 %v697, %v697
    %v699 = vld [vmem:[#allocation8] sm:$0xf]
    %v700 = vld [vmem:[#allocation8 + $0x4] sm:$0xf]
    %v701 = vld [vmem:[#allocation8 + $0x8] sm:$0xf]
    %v702 = vld [vmem:[#allocation8 + $0xc] sm:$0xf]
    %v703 = vld [vmem:[#allocation10] sm:$0x1]
    %v705 = vlaneseq
    %v706 = vshrl.u32 %v705, 7
    %v707 = vsub.s32 0, %v706
    %v708 = vrot.slane %v703, %v707
    %v714 = vunpack.c.l.b16 %v699
    %v715 = vunpack.c.l.b16 %v700
    %v716 = vunpack.c.l.b16 %v701
    %v717 = vunpack.c.l.b16 %v702
    %v718 = vpack.c.b16 %v715, %v714
    %v719 = vpack.c.b16 %v717, %v716
    %vm722 = vcmask 261120
    %v724 = vsel %vm722, %v698, 0
    %726 = vmatprep.subr.bf16.mxu0 0
    %727 = vmatpush1.bf16.msra.mxu0 %v718
    %728 = vmatprep.subr.bf16.mxu0 0
    %729 = vmatpush1.bf16.msra.mxu0 %v719
    %730 = vmatprep.subr.bf16.mxu0 0
    %731 = vmatpush1.bf16.msra.mxu0 0
    %732 = vmatprep.subr.bf16.mxu0 0
    %733 = vmatpush1.bf16.msra.mxu0 0
    %734 = vmatprep.subr.bf16.mxu0 0
    %735 = vmatpush1.bf16.msra.mxu0 0
    %736 = vmatprep.subr.bf16.mxu0 0
    %737 = vmatpush1.bf16.msra.mxu0 0
    %738 = vmatprep.subr.bf16.mxu0 0
    %739 = vmatpush1.bf16.msra.mxu0 0
    %740 = vmatprep.subr.bf16.mxu0 0
    %741 = vmatpush1.bf16.msra.mxu0 0
    %742 = vmatprep.subr.bf16.mxu0 0
    %743 = vmatpush1.bf16.msra.mxu0 0
    %744 = vmatprep.subr.bf16.mxu0 0
    %745 = vmatpush1.bf16.msra.mxu0 0
    %746 = vmatprep.subr.bf16.mxu0 0
    %747 = vmatpush1.bf16.msra.mxu0 0
    %748 = vmatprep.subr.bf16.mxu0 0
    %749 = vmatpush1.bf16.msra.mxu0 0
    %750 = vmatprep.subr.bf16.mxu0 0
    %751 = vmatpush1.bf16.msra.mxu0 0
    %752 = vmatprep.subr.bf16.mxu0 0
    %753 = vmatpush1.bf16.msra.mxu0 0
    %754 = vmatprep.subr.bf16.mxu0 0
    %755 = vmatpush1.bf16.msra.mxu0 0
    %756 = vmatprep.subr.bf16.mxu0 0
    %757 = vmatpush1.bf16.msra.mxu0 0
    %758 = vmatprep.mubr.bf16.mxu0 0
    %759 = vmatmul.mubr.bf16.gmra.mrb[0].mxu0 %v724
    %v760 = vpop.f32.mrb[0].mxu0
    %v761 = vadd.f32 %v708, %v760
    %v762 = vpop.f32.mrb[0].mxu0
    %v763 = vpop.f32.mrb[0].mxu0
    %v764 = vpop.f32.mrb[0].mxu0
    %765 = vdwg.mxu0
    %v766 = vxor.u32 %v761, 2147483648
    %v767 = vmul.f32 %v766, 1.442695
    %v768 = vpow.pop %v767
    %v769 = vadd.f32 %v768, 1.0
    %v770 = vrcp.pop %v769
    %v771 = vmul.f32 1.0, %v770
    %v772 = vpack.c.bf16 %v771, %v771
    %v773 = vld [vmem:[#allocation11] sm:$0xf]
    %v774 = vld [vmem:[#allocation11 + $0x4] sm:$0xf]
    %v775 = vld [vmem:[#allocation11 + $0x8] sm:$0xf]
    %v776 = vld [vmem:[#allocation11 + $0xc] sm:$0xf]
    %v777 = vld [vmem:[#allocation13] sm:$0x1]
    %v779 = vlaneseq
    %v780 = vshrl.u32 %v779, 7
    %v781 = vsub.s32 0, %v780
    %v782 = vrot.slane %v777, %v781
    %v788 = vunpack.c.l.b16 %v773
    %v789 = vunpack.c.l.b16 %v774
    %v790 = vunpack.c.l.b16 %v775
    %v791 = vunpack.c.l.b16 %v776
    %v792 = vpack.c.b16 %v789, %v788
    %v793 = vpack.c.b16 %v791, %v790
    %v797 = vsel %vm722, %v772, 0
    %799 = vmatprep.subr.bf16.mxu0 0
    %800 = vmatpush1.bf16.msra.mxu0 %v792
    %801 = vmatprep.subr.bf16.mxu0 0
    %802 = vmatpush1.bf16.msra.mxu0 %v793
    %803 = vmatprep.subr.bf16.mxu0 0
    %804 = vmatpush1.bf16.msra.mxu0 0
    %805 = vmatprep.subr.bf16.mxu0 0
    %806 = vmatpush1.bf16.msra.mxu0 0
    %807 = vmatprep.subr.bf16.mxu0 0
    %808 = vmatpush1.bf16.msra.mxu0 0
    %809 = vmatprep.subr.bf16.mxu0 0
    %810 = vmatpush1.bf16.msra.mxu0 0
    %811 = vmatprep.subr.bf16.mxu0 0
    %812 = vmatpush1.bf16.msra.mxu0 0
    %813 = vmatprep.subr.bf16.mxu0 0
    %814 = vmatpush1.bf16.msra.mxu0 0
    %815 = vmatprep.subr.bf16.mxu0 0
    %816 = vmatpush1.bf16.msra.mxu0 0
    %817 = vmatprep.subr.bf16.mxu0 0
    %818 = vmatpush1.bf16.msra.mxu0 0
    %819 = vmatprep.subr.bf16.mxu0 0
    %820 = vmatpush1.bf16.msra.mxu0 0
    %821 = vmatprep.subr.bf16.mxu0 0
    %822 = vmatpush1.bf16.msra.mxu0 0
    %823 = vmatprep.subr.bf16.mxu0 0
    %824 = vmatpush1.bf16.msra.mxu0 0
    %825 = vmatprep.subr.bf16.mxu0 0
    %826 = vmatpush1.bf16.msra.mxu0 0
    %827 = vmatprep.subr.bf16.mxu0 0
    %828 = vmatpush1.bf16.msra.mxu0 0
    %829 = vmatprep.subr.bf16.mxu0 0
    %830 = vmatpush1.bf16.msra.mxu0 0
    %831 = vmatprep.mubr.bf16.mxu0 0
    %832 = vmatmul.mubr.bf16.gmra.mrb[0].mxu0 %v797
    %v833 = vpop.f32.mrb[0].mxu0
    %v834 = vadd.f32 %v782, %v833
    %v835 = vpop.f32.mrb[0].mxu0
    %v836 = vpop.f32.mrb[0].mxu0
    %v837 = vpop.f32.mrb[0].mxu0
    %838 = vdwg.mxu0
    %839 = vmax.xlane.f32.xlu0 %v834
    %v840 = vpop.xlane.xlu0 %839
    %v841 = vsub.f32 %v834, %v840
    %v842 = vmul.f32 %v841, 1.442695
    %v843 = vpow.pop %v842
    %844 = vadd.xlane.f32.xlu0 %v843
    %v845 = vpop.xlane.xlu0 %844
    %v846 = vlog2.pop %v845
    %v847 = vmul.f32 %v846, 0.6931472
    %v848 = vsub.f32 %v841, %v847
    %849 = vst [vmem:[#allocation14] sm:$0xff] %v848
    // Predicated region
    $region58: #{tpu_custom_call.1} parent=1 // pred_check
      _
    $region59: #{tpu_custom_call.1} parent=1 // pred_check_branch
      %851 = sbr.rel (0) target = $region61
    $region60: #{tpu_custom_call.1} parent=1 // pred_region
      %s853 = ssub.s32 128, 128
      %854 = vsyncadd [#allocation4], %s853
      %s856 = sshll.u32 [#allocation14], 4
      %s857 = int_to_ptr.vmem [resolvable:$true] %s856
      %859 = dma.vmem_to_hbm [thread:$0]  %s857, 128, %s7, [#allocation4]
    $region61: #{tpu_custom_call.1} parent=1 // pred_fallthru
      _
    // Predicated region
    $region62: #{tpu_custom_call.1} parent=1 // pred_check
      _
    $region63: #{tpu_custom_call.1} parent=1 // pred_check_branch
      %861 = sbr.rel (0) target = $region65
    $region64: #{tpu_custom_call.1} parent=1 // pred_region
      %862 = dma.done [#allocation4], 128
    $region65: #{tpu_custom_call.1} parent=1 // pred_fallthru
      _
    %863 = vsyncpa [#allocation3], 1
    %864 = vsyncpa [#allocation6], 1
    %865 = vsyncpa [#allocation9], 1
    %866 = vsyncpa [#allocation12], 1
    %867 = vsyncpa [#allocation4], 1

</llo_original>
